<compile_context>
chip_gen: v5e
topology: v5e:2x2
jax: 0.10.0
libtpu: 0.0.40
codegen_flags: <defaults>
</compile_context>

<pallas_src>
import functools

import jax
import jax.numpy as jnp
from jax import lax
from jax.experimental import pallas as pl
from jax.experimental.pallas import tpu as pltpu

_LANES = 128
_MAX_TILE_ROWS = 2048      # 2048 * 128 * 4 B = 1 MiB per input tile
_NUM_CORES = 2             # leading parallel grid axis (v7x dual TensorCore)


def _mae_kernel(pred_ref, target_ref, cnt_ref, sum_ref, *,
                rows_valid, tile_rows, tiles_per_core):
    c = pl.program_id(0)
    i = pl.program_id(1)

    @pl.when(i == 0)
    def _():
        cnt_ref[...] = jnp.zeros_like(cnt_ref)
        sum_ref[...] = jnp.zeros_like(sum_ref)

    t = target_ref[...]
    p = pred_ref[...]

    # Valid pixel: depth > 0 AND the row is actually inside the real array.
    # Rows >= rows_valid belong to an out-of-bounds tail block whose contents
    # are unspecified, so they are masked by index, not by data.
    row0 = (c * tiles_per_core + i) * tile_rows
    local_row = lax.broadcasted_iota(jnp.int32, (tile_rows, _LANES), 0)
    in_bounds = (row0 + local_row) < rows_valid
    mask = jnp.logical_and(t > 0.0, in_bounds)

    abs_err = jnp.where(mask, jnp.abs(p - t), 0.0)
    cnt = mask.astype(jnp.float32)

    # Fold the (tile_rows, 128) tile down to a single (8, 128) vreg using pure
    # elementwise VPU adds and accumulate into this core's resident output
    # block.  The one cross-lane reduction happens once, in JAX, afterwards.
    sub = tile_rows // 8
    cnt_ref[...] += cnt.reshape(sub, 8, _LANES).sum(axis=0)[None]
    sum_ref[...] += abs_err.reshape(sub, 8, _LANES).sum(axis=0)[None]


def mae(pred: jax.Array, target: jax.Array) -> jax.Array:
    """Masked mean absolute error (scalar). Returns -1.0 if < 10 valid pixels."""
    assert pred.shape == target.shape

    pred_f = pred.reshape(-1).astype(jnp.float32)
    target_f = target.reshape(-1).astype(jnp.float32)
    n_elem = pred_f.shape[0]

    # Pad only up to a whole (8, 128) row group (<= 1023 elements).  Padded
    # target entries are 0 -> invalid -> excluded by the mask.  This is a
    # no-op (no HBM copy) whenever n_elem is already a multiple of 1024.
    pad = (-n_elem) % (8 * _LANES)
    if pad:
        pred_f = jnp.pad(pred_f, (0, pad))
        target_f = jnp.pad(target_f, (0, pad))

    rows = (n_elem + pad) // _LANES
    pred2d = pred_f.reshape(rows, _LANES)
    target2d = target_f.reshape(rows, _LANES)

    tile_rows = min(_MAX_TILE_ROWS, rows)            # always a multiple of 8
    tiles_total = pl.cdiv(rows, tile_rows)
    tiles_per_core = pl.cdiv(tiles_total, _NUM_CORES)

    def _in_index_map(c, i):
        # Clamp so the block index always stays in range; logically-OOB steps
        # (when tiles_total is odd / small) are fully masked in the kernel via
        # the row-index mask, so the duplicated data contributes nothing.
        return (jnp.minimum(c * tiles_per_core + i, tiles_total - 1), 0)

    kernel = functools.partial(
        _mae_kernel,
        rows_valid=rows,
        tile_rows=tile_rows,
        tiles_per_core=tiles_per_core,
    )

    cnt_part, sum_part = pl.pallas_call(
        kernel,
        out_shape=(
            jax.ShapeDtypeStruct((_NUM_CORES, 8, _LANES), jnp.float32),
            jax.ShapeDtypeStruct((_NUM_CORES, 8, _LANES), jnp.float32),
        ),
        grid_spec=pltpu.PrefetchScalarGridSpec(
            num_scalar_prefetch=0,
            grid=(_NUM_CORES, tiles_per_core),
            in_specs=[
                pl.BlockSpec((tile_rows, _LANES), _in_index_map),
                pl.BlockSpec((tile_rows, _LANES), _in_index_map),
            ],
            out_specs=[
                pl.BlockSpec((1, 8, _LANES), lambda c, i: (c, 0, 0)),
                pl.BlockSpec((1, 8, _LANES), lambda c, i: (c, 0, 0)),
            ],
        ),
        compiler_params=pltpu.CompilerParams(
            dimension_semantics=("parallel", "arbitrary"),
            vmem_limit_bytes=32 * 1024 * 1024,
        ),
    )(pred2d, target2d)

    num_pixels = jnp.sum(cnt_part)
    abs_sum = jnp.sum(sum_part)
    safe_n = jnp.maximum(num_pixels, 1.0)
    mae_val = abs_sum / safe_n
    # TODO(synk): the PyTorch module returns a host Python scalar via .item();
    # the "< 10 valid pixels -> -1" early return is expressed as a device select.
    return jnp.where(num_pixels < 10.0, jnp.float32(-1.0), mae_val)


def _mae_ref(pred, target):
    """Pure-JAX reference mirroring the PyTorch module."""
    mask = target > 0
    n = jnp.sum(mask.astype(jnp.float32))
    abs_err = jnp.where(mask, jnp.abs(pred - target), 0.0)
    val = jnp.sum(abs_err) / jnp.maximum(n, 1.0)
    return jnp.where(n < 10.0, jnp.float32(-1.0), val)


if __name__ == "__main__":
    key = jax.random.PRNGKey(0)
    k1, k2, k3 = jax.random.split(key, 3)

    N, C, H, W = 2, 1, 16, 16  # depth maps: 1 channel, NCHW
    pred = jax.random.uniform(k1, (N, C, H, W), jnp.float32,
                              minval=0.1, maxval=10.0)
    target = jax.random.uniform(k2, (N, C, H, W), jnp.float32,
                                minval=0.1, maxval=10.0)
    # Knock out ~30% of target pixels to exercise the validity mask.
    drop = jax.random.bernoulli(k3, 0.3, (N, C, H, W))
    target = jnp.where(drop, 0.0, target)

    out = jax.block_until_ready(mae(pred, target))
    ref = jax.block_until_ready(_mae_ref(pred, target))
    assert jnp.allclose(out, ref, rtol=1e-5, atol=1e-5), (out, ref)

    # Fewer than 10 valid pixels -> -1 branch.
    target_sparse = jnp.zeros((N, C, H, W), jnp.float32).at[0, 0, 0, :5].set(1.0)
    out2 = jax.block_until_ready(mae(pred, target_sparse))
    assert jnp.allclose(out2, jnp.float32(-1.0)), out2

    print("KERNEL_OK")
</pallas_src>

<mosaic_0001>
module attributes {stable_mosaic.version = 11 : i64} {
  func.func @_mae_kernel(%arg0: i32, %arg1: i32, %arg2: memref<8x128xf32, #tpu.memory_space<vmem>>, %arg3: memref<8x128xf32, #tpu.memory_space<vmem>>, %arg4: memref<1x8x128xf32, #tpu.memory_space<vmem>>, %arg5: memref<1x8x128xf32, #tpu.memory_space<vmem>>) attributes {dimension_semantics = [#tpu.dimension_semantics<parallel>, #tpu.dimension_semantics<arbitrary>], iteration_bounds = array<i64: 2, 1>, scalar_prefetch = 0 : i64, scratch_operands = 0 : i64, tpu.core_type = #tpu.core_type<tc>, window_params = [{transform_indices = @transform_0, window_bounds = array<i64: 8, 128>}, {transform_indices = @transform_1, window_bounds = array<i64: 8, 128>}, {transform_indices = @transform_2, window_bounds = array<i64: 1, 8, 128>}, {transform_indices = @transform_3, window_bounds = array<i64: 1, 8, 128>}]} {
    %c0_i32 = arith.constant 0 : i32
    %0 = arith.cmpi eq, %arg1, %c0_i32 : i32
    %1 = arith.extui %0 : i1 to i32
    %c0_i32_0 = arith.constant 0 : i32
    %2 = arith.cmpi ne, %1, %c0_i32_0 : i32
    scf.if %2 {
      %cst_20 = arith.constant 0.000000e+00 : f32
      %34 = vector.broadcast %cst_20 : f32 to vector<1x8x128xf32>
      %c0_21 = arith.constant 0 : index
      %c0_22 = arith.constant 0 : index
      %c0_23 = arith.constant 0 : index
      %35 = vector.load %arg4[%c0_21, %c0_22, %c0_23] : memref<1x8x128xf32, #tpu.memory_space<vmem>>, vector<1x8x128xf32>
      tpu.vector_store %arg4[%c0_21, %c0_22, %c0_23], %34 {strides = array<i32>} : memref<1x8x128xf32, #tpu.memory_space<vmem>>, vector<1x8x128xf32>,
      %cst_24 = arith.constant 0.000000e+00 : f32
      %36 = vector.broadcast %cst_24 : f32 to vector<1x8x128xf32>
      %c0_25 = arith.constant 0 : index
      %c0_26 = arith.constant 0 : index
      %c0_27 = arith.constant 0 : index
      %37 = vector.load %arg5[%c0_25, %c0_26, %c0_27] : memref<1x8x128xf32, #tpu.memory_space<vmem>>, vector<1x8x128xf32>
      tpu.vector_store %arg5[%c0_25, %c0_26, %c0_27], %36 {strides = array<i32>} : memref<1x8x128xf32, #tpu.memory_space<vmem>>, vector<1x8x128xf32>,
    } else {
    }
    %c0 = arith.constant 0 : index
    %c0_1 = arith.constant 0 : index
    %3 = vector.load %arg3[%c0, %c0_1] : memref<8x128xf32, #tpu.memory_space<vmem>>, vector<8x128xf32>
    %c0_2 = arith.constant 0 : index
    %c0_3 = arith.constant 0 : index
    %4 = vector.load %arg2[%c0_2, %c0_3] : memref<8x128xf32, #tpu.memory_space<vmem>>, vector<8x128xf32>
    %c1_i32 = arith.constant 1 : i32
    %5 = arith.muli %arg0, %c1_i32 : i32
    %6 = arith.addi %5, %arg1 : i32
    %c8_i32 = arith.constant 8 : i32
    %7 = arith.muli %6, %c8_i32 : i32
    %8 = tpu.iota {dimensions = array<i32: 0>} : vector<8x128xi32>
    %9 = vector.broadcast %7 : i32 to vector<8x128xi32>
    %10 = arith.addi %9, %8 : vector<8x128xi32>
    %c8_i32_4 = arith.constant 8 : i32
    %11 = vector.broadcast %c8_i32_4 : i32 to vector<8x128xi32>
    %12 = arith.cmpi slt, %10, %11 : vector<8x128xi32>
    %cst = arith.constant 0.000000e+00 : f32
    %13 = vector.broadcast %cst : f32 to vector<8x128xf32>
    %14 = arith.cmpf ogt, %3, %13 : vector<8x128xf32>
    %15 = arith.andi %14, %12 : vector<8x128xi1>
    %16 = arith.subf %4, %3 : vector<8x128xf32>
    %17 = math.absf %16 : vector<8x128xf32>
    %cst_5 = arith.constant 0.000000e+00 : f32
    %18 = vector.broadcast %cst_5 : f32 to vector<8x128xf32>
    %19 = arith.select %15, %17, %18 : vector<8x128xi1>, vector<8x128xf32>
    %20 = arith.extui %15 : vector<8x128xi1> to vector<8x128xi32>
    %21 = arith.sitofp %20 : vector<8x128xi32> to vector<8x128xf32>
    %c0_6 = arith.constant 0 : index
    %c0_7 = arith.constant 0 : index
    %c0_8 = arith.constant 0 : index
    %22 = vector.load %arg4[%c0_6, %c0_7, %c0_8] : memref<1x8x128xf32, #tpu.memory_space<vmem>>, vector<1x8x128xf32>
    %23 = vector.shape_cast %21 : vector<8x128xf32> to vector<1x8x128xf32>
    %cst_9 = arith.constant dense<0.000000e+00> : vector<8x128xf32>
    %24 = vector.multi_reduction <add>, %23, %cst_9 [0] : vector<1x8x128xf32> to vector<8x128xf32>
    %25 = vector.shape_cast %24 : vector<8x128xf32> to vector<1x8x128xf32>
    %26 = arith.addf %22, %25 : vector<1x8x128xf32>
    %c0_10 = arith.constant 0 : index
    %c0_11 = arith.constant 0 : index
    %c0_12 = arith.constant 0 : index
    %27 = vector.load %arg4[%c0_10, %c0_11, %c0_12] : memref<1x8x128xf32, #tpu.memory_space<vmem>>, vector<1x8x128xf32>
    tpu.vector_store %arg4[%c0_10, %c0_11, %c0_12], %26 {strides = array<i32>} : memref<1x8x128xf32, #tpu.memory_space<vmem>>, vector<1x8x128xf32>,
    %c0_13 = arith.constant 0 : index
    %c0_14 = arith.constant 0 : index
    %c0_15 = arith.constant 0 : index
    %28 = vector.load %arg5[%c0_13, %c0_14, %c0_15] : memref<1x8x128xf32, #tpu.memory_space<vmem>>, vector<1x8x128xf32>
    %29 = vector.shape_cast %19 : vector<8x128xf32> to vector<1x8x128xf32>
    %cst_16 = arith.constant dense<0.000000e+00> : vector<8x128xf32>
    %30 = vector.multi_reduction <add>, %29, %cst_16 [0] : vector<1x8x128xf32> to vector<8x128xf32>
    %31 = vector.shape_cast %30 : vector<8x128xf32> to vector<1x8x128xf32>
    %32 = arith.addf %28, %31 : vector<1x8x128xf32>
    %c0_17 = arith.constant 0 : index
    %c0_18 = arith.constant 0 : index
    %c0_19 = arith.constant 0 : index
    %33 = vector.load %arg5[%c0_17, %c0_18, %c0_19] : memref<1x8x128xf32, #tpu.memory_space<vmem>>, vector<1x8x128xf32>
    tpu.vector_store %arg5[%c0_17, %c0_18, %c0_19], %32 {strides = array<i32>} : memref<1x8x128xf32, #tpu.memory_space<vmem>>, vector<1x8x128xf32>,
    return
  }
  func.func @transform_0(%arg0: i32, %arg1: i32) -> (i32, i32) {
    %c1_i32 = arith.constant 1 : i32
    %0 = arith.muli %arg0, %c1_i32 : i32
    %1 = arith.addi %0, %arg1 : i32
    %c0_i32 = arith.constant 0 : i32
    %2 = arith.minsi %1, %c0_i32 : i32
    %c0_i32_0 = arith.constant 0 : i32
    %c0_i32_1 = arith.constant 0 : i32
    return %2, %c0_i32_0 : i32, i32
  }
  func.func @transform_1(%arg0: i32, %arg1: i32) -> (i32, i32) {
    %c1_i32 = arith.constant 1 : i32
    %0 = arith.muli %arg0, %c1_i32 : i32
    %1 = arith.addi %0, %arg1 : i32
    %c0_i32 = arith.constant 0 : i32
    %2 = arith.minsi %1, %c0_i32 : i32
    %c0_i32_0 = arith.constant 0 : i32
    %c0_i32_1 = arith.constant 0 : i32
    return %2, %c0_i32_0 : i32, i32
  }
  func.func @transform_2(%arg0: i32, %arg1: i32) -> (i32, i32, i32) {
    %c0_i32 = arith.constant 0 : i32
    %c0_i32_0 = arith.constant 0 : i32
    %c0_i32_1 = arith.constant 0 : i32
    return %arg0, %c0_i32, %c0_i32_0 : i32, i32, i32
  }
  func.func @transform_3(%arg0: i32, %arg1: i32) -> (i32, i32, i32) {
    %c0_i32 = arith.constant 0 : i32
    %c0_i32_0 = arith.constant 0 : i32
    %c0_i32_1 = arith.constant 0 : i32
    return %arg0, %c0_i32, %c0_i32_0 : i32, i32, i32
  }
}

</mosaic_0001>

<llo_original>
// kernel: tpu_custom_call.1
$region0: #{tpu_custom_call.1}
  #allocation0 [shape = 'u32[]', space=smem, size = 0x4, offset = 0x4, fixed_abs, tag = 'smem constant byte address 0x4 - core index']
  #allocation1 [shape = 'u32[72,128]{1,0:T(1,128)}', space=vmem, size = 0x9000, scoped, tag = 'internal scratch']
  %s0 = inlined_call_operand.hbm [shape: f32[8,128], index: 0, kind: input, shape index: {}]
  %s1 = inlined_call_operand.hbm [shape: f32[8,128], index: 1, kind: input, shape index: {}]
  %s2 = inlined_call_operand.hbm [shape: f32[2,8,128], index: 2, kind: output, shape index: {0}]
  %s3 = inlined_call_operand.hbm [shape: f32[2,8,128], index: 3, kind: output, shape index: {1}]
  %4 = xla_tuple %s2, %s3
  %s5 = sld [smem:[#allocation0]]
  $region61: #{tpu_custom_call.1} parent=0
    _
  %s7 = ssub.s32 1, %s5
  %s8 = scalar_select 0, %s7, %s5
  $region1: #{tpu_custom_call.1} parent=0
    #allocation2 [shape = 'u8[8192]{0}', space=vmem, size = 0x2000, scoped, tag = 'input window, operand 0']
    #allocation3 [shape = 's32[2]{0}', space=sflag, size = 0x8, scoped, tag = 'scoped memory for tpu_custom_call.1']
    #allocation4 [shape = 's32[2]{0}', space=sflag, size = 0x8, scoped, tag = 'scoped memory for tpu_custom_call.1']
    #allocation5 [shape = 'u8[8192]{0}', space=vmem, size = 0x2000, scoped, tag = 'input window, operand 1']
    #allocation6 [shape = 's32[2]{0}', space=sflag, size = 0x8, scoped, tag = 'scoped memory for tpu_custom_call.1']
    #allocation7 [shape = 'u8[8192]{0}', space=vmem, size = 0x2000, scoped, tag = 'output window, operand 0']
    #allocation8 [shape = 'u8[8192]{0}', space=vmem, size = 0x2000, scoped, tag = 'output window, operand 1']
    #allocation9 [shape = 's32[2]{0}', space=sflag, size = 0x8, scoped, tag = 'scoped memory for tpu_custom_call.1']
    %9 = vsyncpa [#allocation3], 0
    %s10 = scalar_lea.sflag [#allocation3], 1
    %11 = vsyncpa %s10, 0
    %12 = vsyncpa [#allocation6], 0
    %s13 = scalar_lea.sflag [#allocation6], 1
    %14 = vsyncpa %s13, 0
    %15 = vsyncpa [#allocation4], 0
    %s16 = scalar_lea.sflag [#allocation4], 1
    %17 = vsyncpa %s16, 0
    %18 = vsyncpa [#allocation9], 0
    %s19 = scalar_lea.sflag [#allocation9], 1
    %20 = vsyncpa %s19, 0
    loop: start=0, step=1, limit=4
    $region2: #{tpu_custom_call.1} parent=1 // loop_pre_header
      _
    $region3: #{tpu_custom_call.1} parent=1 // loop_header
      %s22 = sphi 0, %s26
      %p23 = scmp.ge.s32.totalorder %s22, 4
      %s29 = sphi 0, %s41
      %s30 = sphi 0, %s37
      %s31 = sphi 0, %s29
      %s32 = sphi 0, %s30
      %s33 = sphi 0, %s31
      %s34 = sphi 0, %s32
      %s50 = sphi 0, %s52
      %s53 = sphi 0, %s50
      %s54 = sphi 0, %s53
      %s70 = sphi 0, %s54
      %s82 = sphi 0, %s84
      %s85 = sphi 0, %s82
      %s86 = sphi 0, %s85
      %s102 = sphi 0, %s86
      %s108 = sphi 0, %s110
      %s111 = sphi 0, %s108
      %s112 = sphi 0, %s111
      %s128 = sphi 0, %s112
      %s134 = sphi 0, %s136
      %s137 = sphi 0, %s134
      %s138 = sphi 0, %s137
      %s154 = sphi 0, %s138
    $region4: #{tpu_custom_call.1} parent=1 // loop_header_branch
      %25 = sbr.rel (%p23) target = $region8
    $region5: #{tpu_custom_call.1} parent=1 // loop_body
      %s27 = ssub.s32 %s22, 1
      %s28 = ssub.s32 %s22, 2
      %s35 = sadd.s32 1, %s30
      %p36 = scmp.ge.s32.totalorder %s35, 1
      %s37 = scalar_select %p36, 0, %s35
      %s38 = sadd.s32 1, %s29
      %s39 = scalar_select %p36, %s38, %s29
      %p40 = scmp.ge.s32.totalorder %s39, 2
      %s41 = scalar_select %p40, 0, %s39
      %s42 = sadd.s32 %s29, %s30
      %p43 = scmp.lt.s32.totalorder %s42, 0
      %s44 = scalar_select %p43, %s42, 0
      %s45 = sadd.s32 %s41, %s37
      %p46 = scmp.lt.s32.totalorder %s45, 0
      %s47 = scalar_select %p46, %s45, 0
      %s48 = ssub.s32 %s44, %s47
      %p49 = scmp.eq.s32.totalorder %s48, 0
      %s51 = sadd.s32 %s50, 1
      %s52 = scalar_select %p49, %s50, %s51
      %p55 = pneg %p49
      %p56 = scmp.eq.s32.totalorder %s22, 1
      %p57 = por %p55, %p56
      %p58 = scmp.ne.s32.totalorder %s50, %s53
      %p59 = scmp.eq.s32.totalorder %s22, 0
      %p60 = por %p58, %p59
      %p61 = scmp.ne.s32.totalorder %s50, %s53
      %p62 = scmp.eq.s32.totalorder %s27, 1
      %p63 = por %p61, %p62
      %p64 = scmp.ne.s32.totalorder %s53, %s54
      %p65 = scmp.eq.s32.totalorder %s27, 0
      %p66 = por %p64, %p65
      %p67 = scmp.ne.s32.totalorder %s53, %s54
      %p68 = scmp.eq.s32.totalorder %s28, 1
      %p69 = por %p67, %p68
      %p71 = scmp.ne.s32.totalorder %s54, %s70
      %p72 = scmp.eq.s32.totalorder %s28, 0
      %p73 = por %p71, %p72
      %s74 = sadd.s32 %s29, %s30
      %p75 = scmp.lt.s32.totalorder %s74, 0
      %s76 = scalar_select %p75, %s74, 0
      %s77 = sadd.s32 %s41, %s37
      %p78 = scmp.lt.s32.totalorder %s77, 0
      %s79 = scalar_select %p78, %s77, 0
      %s80 = ssub.s32 %s76, %s79
      %p81 = scmp.eq.s32.totalorder %s80, 0
      %s83 = sadd.s32 %s82, 1
      %s84 = scalar_select %p81, %s82, %s83
      %p87 = pneg %p81
      %p88 = scmp.eq.s32.totalorder %s22, 1
      %p89 = por %p87, %p88
      %p90 = scmp.ne.s32.totalorder %s82, %s85
      %p91 = scmp.eq.s32.totalorder %s22, 0
      %p92 = por %p90, %p91
      %p93 = scmp.ne.s32.totalorder %s82, %s85
      %p94 = scmp.eq.s32.totalorder %s27, 1
      %p95 = por %p93, %p94
      %p96 = scmp.ne.s32.totalorder %s85, %s86
      %p97 = scmp.eq.s32.totalorder %s27, 0
      %p98 = por %p96, %p97
      %p99 = scmp.ne.s32.totalorder %s85, %s86
      %p100 = scmp.eq.s32.totalorder %s28, 1
      %p101 = por %p99, %p100
      %p103 = scmp.ne.s32.totalorder %s86, %s102
      %p104 = scmp.eq.s32.totalorder %s28, 0
      %p105 = por %p103, %p104
      %s106 = ssub.s32 %s29, %s41
      %p107 = scmp.eq.s32.totalorder %s106, 0
      %s109 = sadd.s32 %s108, 1
      %s110 = scalar_select %p107, %s108, %s109
      %p113 = pneg %p107
      %p114 = scmp.eq.s32.totalorder %s22, 1
      %p115 = por %p113, %p114
      %p116 = scmp.ne.s32.totalorder %s108, %s111
      %p117 = scmp.eq.s32.totalorder %s22, 0
      %p118 = por %p116, %p117
      %p119 = scmp.ne.s32.totalorder %s108, %s111
      %p120 = scmp.eq.s32.totalorder %s27, 1
      %p121 = por %p119, %p120
      %p122 = scmp.ne.s32.totalorder %s111, %s112
      %p123 = scmp.eq.s32.totalorder %s27, 0
      %p124 = por %p122, %p123
      %p125 = scmp.ne.s32.totalorder %s111, %s112
      %p126 = scmp.eq.s32.totalorder %s28, 1
      %p127 = por %p125, %p126
      %p129 = scmp.ne.s32.totalorder %s112, %s128
      %p130 = scmp.eq.s32.totalorder %s28, 0
      %p131 = por %p129, %p130
      %s132 = ssub.s32 %s29, %s41
      %p133 = scmp.eq.s32.totalorder %s132, 0
      %s135 = sadd.s32 %s134, 1
      %s136 = scalar_select %p133, %s134, %s135
      %p139 = pneg %p133
      %p140 = scmp.eq.s32.totalorder %s22, 1
      %p141 = por %p139, %p140
      %p142 = scmp.ne.s32.totalorder %s134, %s137
      %p143 = scmp.eq.s32.totalorder %s22, 0
      %p144 = por %p142, %p143
      %p145 = scmp.ne.s32.totalorder %s134, %s137
      %p146 = scmp.eq.s32.totalorder %s27, 1
      %p147 = por %p145, %p146
      %p148 = scmp.ne.s32.totalorder %s137, %s138
      %p149 = scmp.eq.s32.totalorder %s27, 0
      %p150 = por %p148, %p149
      %p151 = scmp.ne.s32.totalorder %s137, %s138
      %p152 = scmp.eq.s32.totalorder %s28, 1
      %p153 = por %p151, %p152
      %p155 = scmp.ne.s32.totalorder %s138, %s154
      %p156 = scmp.eq.s32.totalorder %s28, 0
      %p157 = por %p155, %p156
      %p158 = scmp.le.s32.totalorder 1, %s22
      %p159 = scmp.lt.s32.totalorder %s22, 3
      %p160 = pnand %p158, %p159
      %p161 = pneg %p160
      // Predicated region
      $region9: #{tpu_custom_call.1} parent=5 // pred_check
        _
      $region10: #{tpu_custom_call.1} parent=5 // pred_check_branch
        %163 = sbr.rel (%p160) target = $region12
      $region11: #{tpu_custom_call.1} parent=5 // pred_region
        %s164 = ssub.s32 %s22, 1
      $region12: #{tpu_custom_call.1} parent=5 // pred_fallthru
        _
      %p165 = scmp.lt.s32.totalorder %s22, 2
      // Predicated region
      $region13: #{tpu_custom_call.1} parent=5 // pred_check
        %p166 = pneg %p165
      $region14: #{tpu_custom_call.1} parent=5 // pred_check_branch
        %168 = sbr.rel (%p166) target = $region16
      $region15: #{tpu_custom_call.1} parent=5 // pred_region
        // Predicated region
        $region17: #{tpu_custom_call.1} parent=15 // pred_check
          %p169 = pneg %p60
        $region18: #{tpu_custom_call.1} parent=15 // pred_check_branch
          %171 = sbr.rel (%p169) target = $region20
        $region19: #{tpu_custom_call.1} parent=15 // pred_region
          %s172 = sand.u32 %s50, 1
          %s173 = scalar_lea.sflag [#allocation3], %s172
          %s174 = sand.u32 %s50, 1
          %s175 = smul.addr %s174, 8
          %s176 = scalar_lea.vmem [#allocation2], %s175
          %s177 = sadd.s32 %s29, %s30
          %p178 = scmp.lt.s32.totalorder %s177, 0
          %s179 = scalar_select %p178, %s177, 0
          %181 = vsyncadd %s173, 0
          %s182 = smul.addr %s179, 8
          %s183 = scalar_lea.hbm %s0, %s182
          %s185 = sshll.u32 %s183, 4
          %s186 = int_to_ptr.hbm [resolvable:$true] %s185
          %s187 = sshll.u32 %s176, 4
          %s188 = int_to_ptr.vmem [resolvable:$true] %s187
          %190 = dma.hbm_to_vmem [thread:$0]  %s186, 128, %s188, %s173
        $region20: #{tpu_custom_call.1} parent=15 // pred_fallthru
          _
        // Predicated region
        $region21: #{tpu_custom_call.1} parent=15 // pred_check
          %p191 = pneg %p92
        $region22: #{tpu_custom_call.1} parent=15 // pred_check_branch
          %193 = sbr.rel (%p191) target = $region24
        $region23: #{tpu_custom_call.1} parent=15 // pred_region
          %s194 = sand.u32 %s82, 1
          %s195 = scalar_lea.sflag [#allocation6], %s194
          %s196 = sand.u32 %s82, 1
          %s197 = smul.addr %s196, 8
          %s198 = scalar_lea.vmem [#allocation5], %s197
          %s199 = sadd.s32 %s29, %s30
          %p200 = scmp.lt.s32.totalorder %s199, 0
          %s201 = scalar_select %p200, %s199, 0
          %203 = vsyncadd %s195, 0
          %s204 = smul.addr %s201, 8
          %s205 = scalar_lea.hbm %s1, %s204
          %s207 = sshll.u32 %s205, 4
          %s208 = int_to_ptr.hbm [resolvable:$true] %s207
          %s209 = sshll.u32 %s198, 4
          %s210 = int_to_ptr.vmem [resolvable:$true] %s209
          %212 = dma.hbm_to_vmem [thread:$0]  %s208, 128, %s210, %s195
        $region24: #{tpu_custom_call.1} parent=15 // pred_fallthru
          _
      $region16: #{tpu_custom_call.1} parent=5 // pred_fallthru
        _
      %p213 = scmp.le.s32.totalorder 1, %s22
      %p214 = scmp.lt.s32.totalorder %s22, 3
      %p215 = pnand %p213, %p214
      %p216 = pneg %p215
      // Predicated region
      $region25: #{tpu_custom_call.1} parent=5 // pred_check
        _
      $region26: #{tpu_custom_call.1} parent=5 // pred_check_branch
        %218 = sbr.rel (%p215) target = $region28
      $region27: #{tpu_custom_call.1} parent=5 // pred_region
        %s219 = ssub.s32 %s22, 1
        %s220 = sand.u32 %s53, 1
        %s221 = scalar_lea.sflag [#allocation3], %s220
        %s222 = sand.u32 %s53, 1
        %s223 = smul.addr %s222, 8
        %s224 = scalar_lea.vmem [#allocation2], %s223
        // Predicated region
        $region29: #{tpu_custom_call.1} parent=27 // pred_check
          %p225 = pneg %p66
        $region30: #{tpu_custom_call.1} parent=27 // pred_check_branch
          %227 = sbr.rel (%p225) target = $region32
        $region31: #{tpu_custom_call.1} parent=27 // pred_region
          %229 = dma.done %s221, 128
        $region32: #{tpu_custom_call.1} parent=27 // pred_fallthru
          _
        %s230 = sand.u32 %s85, 1
        %s231 = scalar_lea.sflag [#allocation6], %s230
        %s232 = sand.u32 %s85, 1
        %s233 = smul.addr %s232, 8
        %s234 = scalar_lea.vmem [#allocation5], %s233
        // Predicated region
        $region33: #{tpu_custom_call.1} parent=27 // pred_check
          %p235 = pneg %p98
        $region34: #{tpu_custom_call.1} parent=27 // pred_check_branch
          %237 = sbr.rel (%p235) target = $region36
        $region35: #{tpu_custom_call.1} parent=27 // pred_region
          %239 = dma.done %s231, 128
        $region36: #{tpu_custom_call.1} parent=27 // pred_fallthru
          _
        %s240 = sand.u32 %s53, 1
        %s241 = scalar_lea.sflag [#allocation3], %s240
        %s242 = sand.u32 %s53, 1
        %s243 = smul.addr %s242, 8
        %s244 = scalar_lea.vmem [#allocation2], %s243
        %p245 = pneg %p66
        %p246 = pneg %p63
        %s247 = sand.u32 %s85, 1
        %s248 = scalar_lea.sflag [#allocation6], %s247
        %s249 = sand.u32 %s85, 1
        %s250 = smul.addr %s249, 8
        %s251 = scalar_lea.vmem [#allocation5], %s250
        %p252 = pneg %p98
        %p253 = pneg %p95
        %p254 = pneg %p124
        %p255 = pneg %p121
        %s256 = sand.u32 %s111, 1
        %s257 = scalar_lea.sflag [#allocation4], %s256
        %s258 = sand.u32 %s111, 1
        %s259 = smul.addr %s258, 8
        %s260 = scalar_lea.vmem [#allocation7], %s259
        %p261 = pneg %p150
        %p262 = pneg %p147
        %s263 = sand.u32 %s137, 1
        %s264 = scalar_lea.sflag [#allocation9], %s263
        %s265 = sand.u32 %s137, 1
        %s266 = smul.addr %s265, 8
        %s267 = scalar_lea.vmem [#allocation8], %s266
        %s268 = sadd.s32 %s31, %s32
        %p269 = scmp.lt.s32.totalorder %s268, 0
        %s270 = scalar_select %p269, %s268, 0
        %s271 = sadd.s32 %s31, %s32
        %p272 = scmp.lt.s32.totalorder %s271, 0
        %s273 = scalar_select %p272, %s271, 0
        %p274 = scmp.eq.s32.totalorder %s32, 0
        // Predicated region
        $region37: #{tpu_custom_call.1} parent=27 // pred_check
          %p275 = pneg %p274
        $region38: #{tpu_custom_call.1} parent=27 // pred_check_branch
          %277 = sbr.rel (%p275) target = $region40
        $region39: #{tpu_custom_call.1} parent=27 // pred_region
          %278 = vst [vmem:[%s260] sm:$0xff] 0.0
          %279 = vst [vmem:[%s267] sm:$0xff] 0.0
        $region40: #{tpu_custom_call.1} parent=27 // pred_fallthru
          _
        %v280 = vld [vmem:[%s234] sm:$0xff]
        %v281 = vld [vmem:[%s224] sm:$0xff]
        %s282 = sadd.s32 %s31, %s32
        %s283 = smul.u32 %s282, 8
        %v284 = vlaneseq
        %v285 = vshrl.u32 %v284, 7
        %v286 = vstv %s283
        %v287 = vadd.s32 %v286, %v285
        %vm288 = vcmp.lt.s32.totalorder %v287, 8
        %vm289 = vcmp.gt.f32.partialorder %v280, 0.0
        %vm290 = vmand %vm289, %vm288
        %v291 = vsub.f32 %v281, %v280
        %v292 = vand.u32 2147483647, %v291
        %v293 = vsel %vm290, %v292, 0.0
        %v294 = vsel %vm290, 1, 0
        %v295 = vcvt.s32.f32 %v294
        %v296 = vld [vmem:[%s260] sm:$0xff]
        %v297 = vadd.f32 %v295, 0.0
        %v298 = vadd.f32 %v296, %v297
        %299 = vst [vmem:[%s260] sm:$0xff] %v298
        %v300 = vld [vmem:[%s267] sm:$0xff]
        %v301 = vadd.f32 %v293, 0.0
        %v302 = vadd.f32 %v300, %v301
        %303 = vst [vmem:[%s267] sm:$0xff] %v302
        %s304 = sand.u32 %s111, 1
        %s305 = scalar_lea.sflag [#allocation4], %s304
        %s306 = sand.u32 %s111, 1
        %s307 = smul.addr %s306, 8
        %s308 = scalar_lea.vmem [#allocation7], %s307
        %s309 = sand.u32 %s137, 1
        %s310 = scalar_lea.sflag [#allocation9], %s309
        %s311 = sand.u32 %s137, 1
        %s312 = smul.addr %s311, 8
        %s313 = scalar_lea.vmem [#allocation8], %s312
        // Predicated region
        $region41: #{tpu_custom_call.1} parent=27 // pred_check
          %p314 = pneg %p121
        $region42: #{tpu_custom_call.1} parent=27 // pred_check_branch
          %316 = sbr.rel (%p314) target = $region44
        $region43: #{tpu_custom_call.1} parent=27 // pred_region
          %318 = vsyncadd %s305, 0
          %s319 = smul.addr %s31, 8
          %s320 = scalar_lea.hbm %s2, %s319
          %s322 = sshll.u32 %s308, 4
          %s323 = int_to_ptr.vmem [resolvable:$true] %s322
          %s324 = sshll.u32 %s320, 4
          %s325 = int_to_ptr.hbm [resolvable:$true] %s324
          %327 = dma.vmem_to_hbm [thread:$0]  %s323, 128, %s325, %s305
        $region44: #{tpu_custom_call.1} parent=27 // pred_fallthru
          _
        // Predicated region
        $region45: #{tpu_custom_call.1} parent=27 // pred_check
          %p328 = pneg %p147
        $region46: #{tpu_custom_call.1} parent=27 // pred_check_branch
          %330 = sbr.rel (%p328) target = $region48
        $region47: #{tpu_custom_call.1} parent=27 // pred_region
          %332 = vsyncadd %s310, 0
          %s333 = smul.addr %s31, 8
          %s334 = scalar_lea.hbm %s3, %s333
          %s336 = sshll.u32 %s313, 4
          %s337 = int_to_ptr.vmem [resolvable:$true] %s336
          %s338 = sshll.u32 %s334, 4
          %s339 = int_to_ptr.hbm [resolvable:$true] %s338
          %341 = dma.vmem_to_hbm [thread:$0]  %s337, 128, %s339, %s310
        $region48: #{tpu_custom_call.1} parent=27 // pred_fallthru
          _
      $region28: #{tpu_custom_call.1} parent=5 // pred_fallthru
        _
      %p342 = scmp.le.s32.totalorder 2, %s22
      // Predicated region
      $region49: #{tpu_custom_call.1} parent=5 // pred_check
        %p343 = pneg %p342
      $region50: #{tpu_custom_call.1} parent=5 // pred_check_branch
        %345 = sbr.rel (%p343) target = $region52
      $region51: #{tpu_custom_call.1} parent=5 // pred_region
        %s346 = ssub.s32 %s22, 2
        // Predicated region
        $region53: #{tpu_custom_call.1} parent=51 // pred_check
          %p347 = pneg %p127
        $region54: #{tpu_custom_call.1} parent=51 // pred_check_branch
          %349 = sbr.rel (%p347) target = $region56
        $region55: #{tpu_custom_call.1} parent=51 // pred_region
          %s350 = sand.u32 %s112, 1
          %s351 = scalar_lea.sflag [#allocation4], %s350
          %s352 = sand.u32 %s112, 1
          %s353 = smul.addr %s352, 8
          %s354 = scalar_lea.vmem [#allocation7], %s353
          %356 = dma.done %s351, 128
        $region56: #{tpu_custom_call.1} parent=51 // pred_fallthru
          _
        // Predicated region
        $region57: #{tpu_custom_call.1} parent=51 // pred_check
          %p357 = pneg %p153
        $region58: #{tpu_custom_call.1} parent=51 // pred_check_branch
          %359 = sbr.rel (%p357) target = $region60
        $region59: #{tpu_custom_call.1} parent=51 // pred_region
          %s360 = sand.u32 %s138, 1
          %s361 = scalar_lea.sflag [#allocation9], %s360
          %s362 = sand.u32 %s138, 1
          %s363 = smul.addr %s362, 8
          %s364 = scalar_lea.vmem [#allocation8], %s363
          %366 = dma.done %s361, 128
        $region60: #{tpu_custom_call.1} parent=51 // pred_fallthru
          _
      $region52: #{tpu_custom_call.1} parent=5 // pred_fallthru
        _
    $region6: #{tpu_custom_call.1} parent=1 // loop_footer
      %s26 = sadd.s32 1, %s22
    $region7: #{tpu_custom_call.1} parent=1 // loop_footer_branch
      %21 = sbr.rel target = $region3
    $region8: #{tpu_custom_call.1} parent=1 // loop_exit
      _
    %367 = vsyncpa [#allocation3], 1
    %s368 = scalar_lea.sflag [#allocation3], 1
    %369 = vsyncpa %s368, 1
    %370 = vsyncpa [#allocation6], 1
    %s371 = scalar_lea.sflag [#allocation6], 1
    %372 = vsyncpa %s371, 1
    %373 = vsyncpa [#allocation4], 1
    %s374 = scalar_lea.sflag [#allocation4], 1
    %375 = vsyncpa %s374, 1
    %376 = vsyncpa [#allocation9], 1
    %s377 = scalar_lea.sflag [#allocation9], 1
    %378 = vsyncpa %s377, 1

</llo_original>
